<compile_context>
chip_gen: v7x
topology: tpu7x:2x2x1
jax: 0.10.0
libtpu: 0.0.40
codegen_flags: <defaults>
</compile_context>

<pallas_src>
import functools
from math import ceil

import jax
import jax.numpy as jnp
from jax.experimental import pallas as pl
from jax.experimental.pallas import tpu as pltpu


# ----------------------------------------------------------------------------
# Helpers
# ----------------------------------------------------------------------------
def _round_up(x, m):
    return ((x + m - 1) // m) * m


def _vmem_limit_bytes():
    # Per-generation budget: ~75% of physical VMEM (96 MiB on v5e/v6e 128 MiB,
    # 48 MiB on v7x 64 MiB).  Falls back to a safe 48 MiB if the query fails.
    try:
        cap = int(pltpu.get_tpu_info().vmem_capacity_bytes)
    except Exception:
        cap = 64 * 1024 * 1024
    return int(cap * 3 // 4)


def _auto_tile_n(n, target=512):
    """Largest divisor of n that is <= target and a multiple of 8 (else n)."""
    t = min(target, n)
    for cand in range(t, 7, -1):
        if n % cand == 0 and cand % 8 == 0:
            return cand
    return n


def _spec(shape, index_map, single_buffer):
    """Grid-invariant blocks get a single buffer (no wasted double-buffer)."""
    if single_buffer:
        return pl.BlockSpec(shape, index_map, pipeline_mode=pl.Buffered(1))
    return pl.BlockSpec(shape, index_map)


# ----------------------------------------------------------------------------
# Pass 1: Linear -> ELU, per-tile partial BatchNorm statistics
# ----------------------------------------------------------------------------
def _pass1_kernel(x_ref, wlin_ref, blin_ref, y_ref, part_ref):
    y = jnp.dot(x_ref[...].astype(jnp.bfloat16), wlin_ref[...],
                preferred_element_type=jnp.float32) + blin_ref[...]
    # ELU(alpha=1); clamp before exp so the dead branch never overflows.
    y = jnp.where(y > 0.0, y, jnp.exp(jnp.minimum(y, 0.0)) - 1.0)
    y_ref[...] = y
    part_ref[0, 0:1, :] = jnp.sum(y, axis=0, keepdims=True)
    part_ref[0, 1:2, :] = jnp.sum(y * y, axis=0, keepdims=True)


# ----------------------------------------------------------------------------
# Pass 2 (optimized): vectorized row gather + K lane-dense bf16 matmuls
# ----------------------------------------------------------------------------
def _pass2_take_kernel(idx_ref, y_ref, weff_ref, beff_ref, out_ref, *, k_taps):
    y = y_ref[...]                                   # (N, C_pad) f32, resident
    acc = jnp.zeros(out_ref.shape, jnp.float32)
    for k in range(k_taps):                          # K is small & static
        idx = idx_ref[0, k, :]                       # (tile_n,) int32
        g = jnp.take(y, idx, axis=0, mode="clip")    # vectorized row gather
        acc += jnp.dot(g.astype(jnp.bfloat16), weff_ref[k],
                       preferred_element_type=jnp.float32)
    out_ref[...] = acc + beff_ref[...]


# ----------------------------------------------------------------------------
# Pass 2 (conservative fallback): rolled SMEM scalar-index gather
# ----------------------------------------------------------------------------
def _pass2_loop_kernel(s_ref, y_ref, weff_ref, beff_ref, out_ref, *g_scs,
                       tile_n, k_taps):
    i = pl.program_id(0)
    base = i * tile_n * k_taps

    def gather_row(n, carry):
        for k in range(k_taps):
            idx = s_ref[base + n * k_taps + k]       # scalar read from SMEM
            g_scs[k][pl.ds(n, 1), :] = y_ref[pl.ds(idx, 1), :]
        return carry

    jax.lax.fori_loop(0, tile_n, gather_row, 0)      # rolled: bounded code size
    acc = jnp.zeros(out_ref.shape, jnp.float32)
    for k in range(k_taps):                          # no concatenate: per-tap dots
        acc += jnp.dot(g_scs[k][...].astype(jnp.bfloat16), weff_ref[k],
                       preferred_element_type=jnp.float32)
    out_ref[...] = acc + beff_ref[...]


# ----------------------------------------------------------------------------
# Wrapper
# ----------------------------------------------------------------------------
def gait_conv_pallas(x, edge_index, kp, *, kernel_size, tile_n=None,
                     gather="take", single_buffer=True):
    N, c_in = x.shape
    K = kernel_size
    c_pad = kp["wlin"].shape[1]
    c_out_pad = kp["weff"].shape[2]

    if tile_n is None:
        tile_n = _auto_tile_n(N)
    assert N % tile_n == 0, "pad x / edge_index so N is a multiple of tile_n"
    num_tiles = N // tile_n
    vmem_limit = _vmem_limit_bytes()

    # -------- pass 1: y = ELU(Linear(x)); per-tile partial BN stats ---------
    y, part = pl.pallas_call(
        _pass1_kernel,
        out_shape=(jax.ShapeDtypeStruct((N, c_pad), jnp.float32),
                   jax.ShapeDtypeStruct((num_tiles, 2, c_pad), jnp.float32)),
        grid_spec=pltpu.PrefetchScalarGridSpec(
            num_scalar_prefetch=0, grid=(num_tiles,),
            in_specs=[pl.BlockSpec((tile_n, c_in), lambda i: (i, 0)),
                      _spec((c_in, c_pad), lambda i: (0, 0), single_buffer),
                      _spec((1, c_pad), lambda i: (0, 0), single_buffer)],
            out_specs=(pl.BlockSpec((tile_n, c_pad), lambda i: (i, 0)),
                       pl.BlockSpec((1, 2, c_pad), lambda i: (i, 0, 0)))),
        compiler_params=pltpu.CompilerParams(
            dimension_semantics=("parallel",),
            vmem_limit_bytes=vmem_limit),
    )(x, kp["wlin"], kp["blin"])

    # -------- tiny glue: reduce partials, fold BN affine into W_eff ----------
    n_total = jnp.float32(N)
    mean = part[:, 0, :].sum(axis=0) / n_total                  # (c_pad,)
    var = jnp.maximum(part[:, 1, :].sum(axis=0) / n_total - mean * mean, 0.0)
    inv_std = jax.lax.rsqrt(var + 1e-5)
    scale = kp["gamma"] * inv_std                               # (c_pad,)
    shift = kp["beta"] - mean * scale                           # (c_pad,)
    weff_rt = (kp["weff"] * scale[None, :, None]).astype(jnp.bfloat16)
    beff_rt = kp["beff"] + shift[None, :] @ kp["weff"].sum(axis=0)

    src = edge_index[1].astype(jnp.int32)                       # (N*K,)

    # -------- pass 2: gather + folded depthwise-conv/Linear matmuls ---------
    if gather == "take":
        # per-tile index block, tap-major so idx_ref[0, k, :] is a lane vector
        idx_kt = src.reshape(num_tiles, tile_n, K).transpose(0, 2, 1)
        p2 = functools.partial(_pass2_take_kernel, k_taps=K)
        out_pad = pl.pallas_call(
            p2,
            out_shape=jax.ShapeDtypeStruct((N, c_out_pad), jnp.float32),
            grid_spec=pltpu.PrefetchScalarGridSpec(
                num_scalar_prefetch=0, grid=(num_tiles,),
                in_specs=[pl.BlockSpec((1, K, tile_n), lambda i: (i, 0, 0)),
                          _spec((N, c_pad), lambda i: (0, 0), single_buffer),
                          _spec((K, c_pad, c_out_pad),
                                lambda i: (0, 0, 0), single_buffer),
                          _spec((1, c_out_pad), lambda i: (0, 0), single_buffer)],
                out_specs=pl.BlockSpec((tile_n, c_out_pad), lambda i: (i, 0))),
            compiler_params=pltpu.CompilerParams(
                dimension_semantics=("parallel",),
                vmem_limit_bytes=vmem_limit),
        )(idx_kt, y, weff_rt, beff_rt)
    else:  # gather == "loop": conservative, previously-validated pattern
        p2 = functools.partial(_pass2_loop_kernel, tile_n=tile_n, k_taps=K)
        out_pad = pl.pallas_call(
            p2,
            out_shape=jax.ShapeDtypeStruct((N, c_out_pad), jnp.float32),
            grid_spec=pltpu.PrefetchScalarGridSpec(
                num_scalar_prefetch=1, grid=(num_tiles,),
                in_specs=[pl.BlockSpec((N, c_pad), lambda i, s: (0, 0)),
                          pl.BlockSpec((K, c_pad, c_out_pad),
                                       lambda i, s: (0, 0, 0)),
                          pl.BlockSpec((1, c_out_pad), lambda i, s: (0, 0))],
                out_specs=pl.BlockSpec((tile_n, c_out_pad), lambda i, s: (i, 0)),
                scratch_shapes=[pltpu.VMEM((tile_n, c_pad), jnp.float32)
                                for _ in range(K)]),
            compiler_params=pltpu.CompilerParams(
                dimension_semantics=("parallel",),
                vmem_limit_bytes=vmem_limit),
        )(src, y, weff_rt, beff_rt)

    return out_pad[:, :kp["c_out"]]                  # drop lane padding


def gait_conv(x, edge_index, kp, *, kernel_size, tile_n=None):
    """Forward pass: optimized config first, conservative retry on lowering failure."""
    try:
        return gait_conv_pallas(x, edge_index, kp, kernel_size=kernel_size,
                                tile_n=tile_n, gather="take", single_buffer=True)
    except Exception:
        return gait_conv_pallas(x, edge_index, kp, kernel_size=kernel_size,
                                tile_n=tile_n, gather="loop", single_buffer=False)


# ----------------------------------------------------------------------------
# Parameters (PyTorch layout for the reference + folded, lane-padded kernel layout)
# ----------------------------------------------------------------------------
def make_params(key, in_channels, out_channels, kernel_size):
    c_in, k = in_channels, kernel_size
    c_delta = in_channels // 4
    dm = int(ceil(out_channels / c_delta))
    c_pad = _round_up(max(c_delta, 1), 128)           # lane-dense hidden dim
    c_out_pad = _round_up(out_channels, 128)          # lane-dense output dim
    ks = jax.random.split(key, 6)

    # PyTorch-layout parameters (used by the pure-JAX reference)
    w_lin = jax.random.normal(ks[0], (c_delta, c_in), jnp.float32) * 0.1
    b_lin = jax.random.normal(ks[1], (c_delta,), jnp.float32) * 0.1
    gamma = jnp.ones((c_delta,), jnp.float32)
    beta = jnp.zeros((c_delta,), jnp.float32)
    w_dw = jax.random.normal(ks[2], (c_delta * dm, 1, k), jnp.float32) * 0.1
    b_dw = jax.random.normal(ks[3], (c_delta * dm,), jnp.float32) * 0.1
    w2 = jax.random.normal(ks[4], (out_channels, c_delta * dm), jnp.float32) * 0.1
    b2 = jax.random.normal(ks[5], (out_channels,), jnp.float32) * 0.1
    torch_params = (w_lin, b_lin, gamma, beta, w_dw, b_dw, w2, b2)

    # ---- fold depthwise Conv1d (groups=C_delta) into the final Linear -------
    # conv output channel j = c*dm + m belongs to group (input channel) c.
    w_dw_r = w_dw.reshape(c_delta, dm, k)                  # [c, m, k]
    w2_r = w2.reshape(out_channels, c_delta, dm)           # [o, c, m]
    w_eff = jnp.einsum("cmk,ocm->kco", w_dw_r, w2_r)       # (K, C_delta, C_out)
    b_eff = b2 + jnp.einsum("cm,ocm->o", b_dw.reshape(c_delta, dm), w2_r)

    # ---- lane-dense zero padding (padded columns stay exactly zero) ---------
    wlin_pad = jnp.zeros((c_in, c_pad), jnp.float32).at[:, :c_delta].set(w_lin.T)
    blin_pad = jnp.zeros((1, c_pad), jnp.float32).at[0, :c_delta].set(b_lin)
    gamma_pad = jnp.zeros((c_pad,), jnp.float32).at[:c_delta].set(gamma)
    beta_pad = jnp.zeros((c_pad,), jnp.float32).at[:c_delta].set(beta)
    weff_pad = (jnp.zeros((k, c_pad, c_out_pad), jnp.float32)
                .at[:, :c_delta, :out_channels].set(w_eff))
    beff_pad = jnp.zeros((1, c_out_pad), jnp.float32).at[0, :out_channels].set(b_eff)

    kernel_params = {
        "wlin": wlin_pad.astype(jnp.bfloat16),             # (C_in, C_pad)
        "blin": blin_pad,                                  # (1, C_pad)
        "gamma": gamma_pad,                                # (C_pad,)
        "beta": beta_pad,                                  # (C_pad,)
        "weff": weff_pad,                                  # (K, C_pad, C_out_pad) f32
        "beff": beff_pad,                                  # (1, C_out_pad)
        "c_out": out_channels,
    }
    return torch_params, kernel_params


# ----------------------------------------------------------------------------
# Pure-JAX reference (PyTorch forward, default config, f32)
# ----------------------------------------------------------------------------
def gait_conv_reference(x, edge_index, torch_params, kernel_size):
    w_lin, b_lin, gamma, beta, w_dw, b_dw, w2, b2 = torch_params
    N = x.shape[0]
    K = kernel_size
    y = x @ w_lin.T + b_lin
    y = jnp.where(y > 0.0, y, jnp.exp(jnp.minimum(y, 0.0)) - 1.0)
    mean = y.mean(axis=0)
    var = ((y - mean) ** 2).mean(axis=0)
    y = (y - mean) / jnp.sqrt(var + 1e-5) * gamma + beta
    g = y[edge_index[1]].reshape(N, K, -1)                 # (N, K, C_delta)
    xs = jnp.transpose(g, (0, 2, 1))                       # (N, C_delta, K)
    c_delta = xs.shape[1]
    dm = w_dw.shape[0] // c_delta
    out_dw = (jnp.einsum("nck,cmk->ncm", xs, w_dw.reshape(c_delta, dm, K))
              + b_dw.reshape(c_delta, dm))
    out_dw = out_dw.reshape(N, c_delta * dm)
    return out_dw @ w2.T + b2


if __name__ == "__main__":
    # small shapes consistent with the module
    N = 64              # number of nodes
    in_channels = 64    # -> hidden_channels = 16 (lane-padded to 128)
    out_channels = 32   # (lane-padded to 128)
    kernel_size = 3     # K neighbors per node

    key = jax.random.PRNGKey(0)
    k_x, k_e, k_p = jax.random.split(key, 3)

    x = jax.random.normal(k_x, (N, in_channels), jnp.float32)
    # edge_index: (2, N*K); row 1 holds the K gathered source nodes per target
    src = jax.random.randint(k_e, (N * kernel_size,), 0, N, dtype=jnp.int32)
    tgt = jnp.repeat(jnp.arange(N, dtype=jnp.int32), kernel_size)
    edge_index = jnp.stack([tgt, src], axis=0)

    torch_params, kernel_params = make_params(
        k_p, in_channels, out_channels, kernel_size)

    # tile_n=16 just to exercise the multi-tile grid at toy sizes; the default
    # (tile_n=None) derives 256-512 row tiles for realistic N.
    out = gait_conv(x, edge_index, kernel_params,
                    kernel_size=kernel_size, tile_n=16)
    out = jax.block_until_ready(out)

    ref = gait_conv_reference(x, edge_index, torch_params, kernel_size)
    assert out.shape == (N, out_channels)
    # bf16 MXU operands -> loosened tolerance vs. the f32 reference
    assert jnp.allclose(out, ref, rtol=5e-2, atol=2e-2), "mismatch vs reference"

    print("KERNEL_OK")
</pallas_src>

<mosaic_0001>
module attributes {stable_mosaic.version = 11 : i64} {
  func.func @_pass1_kernel(%arg0: i32, %arg1: memref<16x64xf32, #tpu.memory_space<vmem>>, %arg2: memref<64x128xbf16, #tpu.memory_space<vmem>>, %arg3: memref<1x128xf32, #tpu.memory_space<vmem>>, %arg4: memref<16x128xf32, #tpu.memory_space<vmem>>, %arg5: memref<1x2x128xf32, #tpu.memory_space<vmem>>) attributes {dimension_semantics = [#tpu.dimension_semantics<parallel>], iteration_bounds = array<i64: 4>, scalar_prefetch = 0 : i64, scratch_operands = 0 : i64, tpu.core_type = #tpu.core_type<tc>, window_params = [{transform_indices = @transform_0, window_bounds = array<i64: 16, 64>}, {pipeline_mode = #tpu.pipeline_mode<synchronous>, transform_indices = @transform_1, window_bounds = array<i64: 64, 128>}, {pipeline_mode = #tpu.pipeline_mode<synchronous>, transform_indices = @transform_2, window_bounds = array<i64: 1, 128>}, {transform_indices = @transform_3, window_bounds = array<i64: 16, 128>}, {transform_indices = @transform_4, window_bounds = array<i64: 1, 2, 128>}]} {
    %c0 = arith.constant 0 : index
    %c0_0 = arith.constant 0 : index
    %0 = vector.load %arg1[%c0, %c0_0] : memref<16x64xf32, #tpu.memory_space<vmem>>, vector<16x64xf32>
    %1 = arith.truncf %0 : vector<16x64xf32> to vector<16x64xbf16>
    %c0_1 = arith.constant 0 : index
    %c0_2 = arith.constant 0 : index
    %2 = vector.load %arg2[%c0_1, %c0_2] : memref<64x128xbf16, #tpu.memory_space<vmem>>, vector<64x128xbf16>
    %cst = arith.constant dense<0.000000e+00> : vector<16x128xf32>
    %3 = tpu.matmul %1, %2, %cst {dimension_numbers = #tpu.dot_dimension_numbers<[1], [0], [0], [1], [0, 0, 1, 1], [], []>} : vector<16x64xbf16>, vector<64x128xbf16>, vector<16x128xf32> -> vector<16x128xf32>
    %c0_3 = arith.constant 0 : index
    %c0_4 = arith.constant 0 : index
    %4 = vector.load %arg3[%c0_3, %c0_4] : memref<1x128xf32, #tpu.memory_space<vmem>>, vector<1x128xf32>
    %5 = vector.broadcast %4 : vector<1x128xf32> to vector<16x128xf32>
    %6 = arith.addf %3, %5 : vector<16x128xf32>
    %cst_5 = arith.constant 0.000000e+00 : f32
    %7 = vector.broadcast %cst_5 : f32 to vector<16x128xf32>
    %8 = arith.cmpf ogt, %6, %7 : vector<16x128xf32>
    %cst_6 = arith.constant 0.000000e+00 : f32
    %9 = vector.broadcast %cst_6 : f32 to vector<16x128xf32>
    %10 = arith.minimumf %6, %9 : vector<16x128xf32>
    %11 = math.exp %10 : vector<16x128xf32>
    %cst_7 = arith.constant 1.000000e+00 : f32
    %12 = vector.broadcast %cst_7 : f32 to vector<16x128xf32>
    %13 = arith.subf %11, %12 : vector<16x128xf32>
    %14 = arith.select %8, %6, %13 : vector<16x128xi1>, vector<16x128xf32>
    %c0_8 = arith.constant 0 : index
    %c0_9 = arith.constant 0 : index
    %15 = vector.load %arg4[%c0_8, %c0_9] : memref<16x128xf32, #tpu.memory_space<vmem>>, vector<16x128xf32>
    tpu.vector_store %arg4[%c0_8, %c0_9], %14 {strides = array<i32>} : memref<16x128xf32, #tpu.memory_space<vmem>>, vector<16x128xf32>,
    %cst_10 = arith.constant dense<0.000000e+00> : vector<128xf32>
    %16 = vector.multi_reduction <add>, %14, %cst_10 [0] : vector<16x128xf32> to vector<128xf32>
    %17 = vector.shape_cast %16 : vector<128xf32> to vector<1x128xf32>
    %c0_11 = arith.constant 0 : index
    %c0_12 = arith.constant 0 : index
    %c0_13 = arith.constant 0 : index
    %18 = vector.load %arg5[%c0_11, %c0_12, %c0_13] : memref<1x2x128xf32, #tpu.memory_space<vmem>>, vector<1x1x128xf32>
    %19 = vector.shape_cast %18 : vector<1x1x128xf32> to vector<1x128xf32>
    %20 = vector.shape_cast %17 : vector<1x128xf32> to vector<1x1x128xf32>
    tpu.vector_store %arg5[%c0_11, %c0_12, %c0_13], %20 {strides = array<i32>} : memref<1x2x128xf32, #tpu.memory_space<vmem>>, vector<1x1x128xf32>,
    %21 = arith.mulf %14, %14 : vector<16x128xf32>
    %cst_14 = arith.constant dense<0.000000e+00> : vector<128xf32>
    %22 = vector.multi_reduction <add>, %21, %cst_14 [0] : vector<16x128xf32> to vector<128xf32>
    %23 = vector.shape_cast %22 : vector<128xf32> to vector<1x128xf32>
    %c0_15 = arith.constant 0 : index
    %c1 = arith.constant 1 : index
    %c0_16 = arith.constant 0 : index
    %24 = vector.load %arg5[%c0_15, %c1, %c0_16] : memref<1x2x128xf32, #tpu.memory_space<vmem>>, vector<1x1x128xf32>
    %25 = vector.shape_cast %24 : vector<1x1x128xf32> to vector<1x128xf32>
    %26 = vector.shape_cast %23 : vector<1x128xf32> to vector<1x1x128xf32>
    tpu.vector_store %arg5[%c0_15, %c1, %c0_16], %26 {strides = array<i32>} : memref<1x2x128xf32, #tpu.memory_space<vmem>>, vector<1x1x128xf32>,
    return
  }
  func.func @transform_0(%arg0: i32) -> (i32, i32) {
    %c0_i32 = arith.constant 0 : i32
    %c0_i32_0 = arith.constant 0 : i32
    return %arg0, %c0_i32 : i32, i32
  }
  func.func @transform_1(%arg0: i32) -> (i32, i32) {
    %c0_i32 = arith.constant 0 : i32
    %c0_i32_0 = arith.constant 0 : i32
    %c0_i32_1 = arith.constant 0 : i32
    return %c0_i32, %c0_i32_0 : i32, i32
  }
  func.func @transform_2(%arg0: i32) -> (i32, i32) {
    %c0_i32 = arith.constant 0 : i32
    %c0_i32_0 = arith.constant 0 : i32
    %c0_i32_1 = arith.constant 0 : i32
    return %c0_i32, %c0_i32_0 : i32, i32
  }
  func.func @transform_3(%arg0: i32) -> (i32, i32) {
    %c0_i32 = arith.constant 0 : i32
    %c0_i32_0 = arith.constant 0 : i32
    return %arg0, %c0_i32 : i32, i32
  }
  func.func @transform_4(%arg0: i32) -> (i32, i32, i32) {
    %c0_i32 = arith.constant 0 : i32
    %c0_i32_0 = arith.constant 0 : i32
    %c0_i32_1 = arith.constant 0 : i32
    return %arg0, %c0_i32, %c0_i32_0 : i32, i32, i32
  }
}

module attributes {stable_mosaic.version = 11 : i64} {
  func.func @_pass1_kernel(%arg0: i32, %arg1: memref<16x64xf32, #tpu.memory_space<vmem>>, %arg2: memref<64x128xbf16, #tpu.memory_space<vmem>>, %arg3: memref<1x128xf32, #tpu.memory_space<vmem>>, %arg4: memref<16x128xf32, #tpu.memory_space<vmem>>, %arg5: memref<1x2x128xf32, #tpu.memory_space<vmem>>) attributes {dimension_semantics = [#tpu.dimension_semantics<parallel>], iteration_bounds = array<i64: 4>, scalar_prefetch = 0 : i64, scratch_operands = 0 : i64, tpu.core_type = #tpu.core_type<tc>, window_params = [{transform_indices = @transform_0, window_bounds = array<i64: 16, 64>}, {pipeline_mode = #tpu.pipeline_mode<synchronous>, transform_indices = @transform_1, window_bounds = array<i64: 64, 128>}, {pipeline_mode = #tpu.pipeline_mode<synchronous>, transform_indices = @transform_2, window_bounds = array<i64: 1, 128>}, {transform_indices = @transform_3, window_bounds = array<i64: 16, 128>}, {transform_indices = @transform_4, window_bounds = array<i64: 1, 2, 128>}]} {
    %c0 = arith.constant 0 : index
    %c0_0 = arith.constant 0 : index
    %0 = vector.load %arg1[%c0, %c0_0] : memref<16x64xf32, #tpu.memory_space<vmem>>, vector<16x64xf32>
    %1 = arith.truncf %0 : vector<16x64xf32> to vector<16x64xbf16>
    %c0_1 = arith.constant 0 : index
    %c0_2 = arith.constant 0 : index
    %2 = vector.load %arg2[%c0_1, %c0_2] : memref<64x128xbf16, #tpu.memory_space<vmem>>, vector<64x128xbf16>
    %cst = arith.constant dense<0.000000e+00> : vector<16x128xf32>
    %3 = tpu.matmul %1, %2, %cst {dimension_numbers = #tpu.dot_dimension_numbers<[1], [0], [0], [1], [0, 0, 1, 1], [], []>} : vector<16x64xbf16>, vector<64x128xbf16>, vector<16x128xf32> -> vector<16x128xf32>
    %c0_3 = arith.constant 0 : index
    %c0_4 = arith.constant 0 : index
    %4 = vector.load %arg3[%c0_3, %c0_4] : memref<1x128xf32, #tpu.memory_space<vmem>>, vector<1x128xf32>
    %5 = vector.broadcast %4 : vector<1x128xf32> to vector<16x128xf32>
    %6 = arith.addf %3, %5 : vector<16x128xf32>
    %cst_5 = arith.constant 0.000000e+00 : f32
    %7 = vector.broadcast %cst_5 : f32 to vector<16x128xf32>
    %8 = arith.cmpf ogt, %6, %7 : vector<16x128xf32>
    %cst_6 = arith.constant 0.000000e+00 : f32
    %9 = vector.broadcast %cst_6 : f32 to vector<16x128xf32>
    %10 = arith.minimumf %6, %9 : vector<16x128xf32>
    %11 = math.exp %10 : vector<16x128xf32>
    %cst_7 = arith.constant 1.000000e+00 : f32
    %12 = vector.broadcast %cst_7 : f32 to vector<16x128xf32>
    %13 = arith.subf %11, %12 : vector<16x128xf32>
    %14 = arith.select %8, %6, %13 : vector<16x128xi1>, vector<16x128xf32>
    %c0_8 = arith.constant 0 : index
    %c0_9 = arith.constant 0 : index
    %15 = vector.load %arg4[%c0_8, %c0_9] : memref<16x128xf32, #tpu.memory_space<vmem>>, vector<16x128xf32>
    tpu.vector_store %arg4[%c0_8, %c0_9], %14 {strides = array<i32>} : memref<16x128xf32, #tpu.memory_space<vmem>>, vector<16x128xf32>,
    %cst_10 = arith.constant dense<0.000000e+00> : vector<128xf32>
    %16 = vector.multi_reduction <add>, %14, %cst_10 [0] : vector<16x128xf32> to vector<128xf32>
    %17 = vector.shape_cast %16 : vector<128xf32> to vector<1x128xf32>
    %c0_11 = arith.constant 0 : index
    %c0_12 = arith.constant 0 : index
    %c0_13 = arith.constant 0 : index
    %18 = vector.load %arg5[%c0_11, %c0_12, %c0_13] : memref<1x2x128xf32, #tpu.memory_space<vmem>>, vector<1x1x128xf32>
    %19 = vector.shape_cast %18 : vector<1x1x128xf32> to vector<1x128xf32>
    %20 = vector.shape_cast %17 : vector<1x128xf32> to vector<1x1x128xf32>
    tpu.vector_store %arg5[%c0_11, %c0_12, %c0_13], %20 {strides = array<i32>} : memref<1x2x128xf32, #tpu.memory_space<vmem>>, vector<1x1x128xf32>,
    %21 = arith.mulf %14, %14 : vector<16x128xf32>
    %cst_14 = arith.constant dense<0.000000e+00> : vector<128xf32>
    %22 = vector.multi_reduction <add>, %21, %cst_14 [0] : vector<16x128xf32> to vector<128xf32>
    %23 = vector.shape_cast %22 : vector<128xf32> to vector<1x128xf32>
    %c0_15 = arith.constant 0 : index
    %c1 = arith.constant 1 : index
    %c0_16 = arith.constant 0 : index
    %24 = vector.load %arg5[%c0_15, %c1, %c0_16] : memref<1x2x128xf32, #tpu.memory_space<vmem>>, vector<1x1x128xf32>
    %25 = vector.shape_cast %24 : vector<1x1x128xf32> to vector<1x128xf32>
    %26 = vector.shape_cast %23 : vector<1x128xf32> to vector<1x1x128xf32>
    tpu.vector_store %arg5[%c0_15, %c1, %c0_16], %26 {strides = array<i32>} : memref<1x2x128xf32, #tpu.memory_space<vmem>>, vector<1x1x128xf32>,
    return
  }
  func.func @transform_0(%arg0: i32) -> (i32, i32) {
    %c0_i32 = arith.constant 0 : i32
    %c0_i32_0 = arith.constant 0 : i32
    return %arg0, %c0_i32 : i32, i32
  }
  func.func @transform_1(%arg0: i32) -> (i32, i32) {
    %c0_i32 = arith.constant 0 : i32
    %c0_i32_0 = arith.constant 0 : i32
    %c0_i32_1 = arith.constant 0 : i32
    return %c0_i32, %c0_i32_0 : i32, i32
  }
  func.func @transform_2(%arg0: i32) -> (i32, i32) {
    %c0_i32 = arith.constant 0 : i32
    %c0_i32_0 = arith.constant 0 : i32
    %c0_i32_1 = arith.constant 0 : i32
    return %c0_i32, %c0_i32_0 : i32, i32
  }
  func.func @transform_3(%arg0: i32) -> (i32, i32) {
    %c0_i32 = arith.constant 0 : i32
    %c0_i32_0 = arith.constant 0 : i32
    return %arg0, %c0_i32 : i32, i32
  }
  func.func @transform_4(%arg0: i32) -> (i32, i32, i32) {
    %c0_i32 = arith.constant 0 : i32
    %c0_i32_0 = arith.constant 0 : i32
    %c0_i32_1 = arith.constant 0 : i32
    return %arg0, %c0_i32, %c0_i32_0 : i32, i32, i32
  }
}

</mosaic_0001>

<llo_original>
// kernel: tpu_custom_call.1
$region0: #{tpu_custom_call.1}
  #allocation0 [shape = 'u32[]', space=smem, size = 0x4, offset = 0x4, fixed_abs, tag = 'smem constant byte address 0x4 - core index']
  #allocation1 [shape = 'u32[144,128]{1,0:T(1,128)}', space=vmem, size = 0x12000, scoped, tag = 'internal scratch']
  %s0 = inlined_call_operand.hbm [shape: f32[64,64], index: 0, kind: input, shape index: {}]
  %s1 = inlined_call_operand.hbm [shape: bf16[64,128], index: 1, kind: input, shape index: {}]
  %s2 = inlined_call_operand.vmem [shape: f32[1,128], index: 2, kind: input, shape index: {}]
  %s3 = inlined_call_operand.hbm [shape: f32[64,128], index: 3, kind: output, shape index: {0}]
  %s4 = inlined_call_operand.hbm [shape: f32[4,2,128], index: 4, kind: output, shape index: {1}]
  %5 = xla_tuple %s3, %s4
  %s6 = sld [smem:[#allocation0]]
  $region61: #{tpu_custom_call.1} parent=0
    _
  %s8 = ssub.s32 1, %s6
  %s9 = scalar_select 0, %s8, %s6
  $region1: #{tpu_custom_call.1} parent=0
    #allocation2 [shape = 'u8[16384]{0}', space=vmem, size = 0x4000, scoped, tag = 'input window, operand 0']
    #allocation3 [shape = 's32[2]{0}', space=sflag, size = 0x8, scoped, tag = 'scoped memory for tpu_custom_call.1']
    #allocation4 [shape = 's32[2]{0}', space=sflag, size = 0x8, scoped, tag = 'scoped memory for tpu_custom_call.1']
    #allocation5 [shape = 'u8[16384]{0}', space=vmem, size = 0x4000, scoped, tag = 'input window, operand 1, single buffered']
    #allocation6 [shape = 's32[1]{0}', space=sflag, size = 0x4, scoped, tag = 'scoped memory for tpu_custom_call.1']
    #allocation7 [shape = 'u8[16384]{0}', space=vmem, size = 0x4000, scoped, tag = 'output window, operand 0']
    #allocation8 [shape = 'u8[2048]{0}', space=vmem, size = 0x800, scoped, tag = 'output window, operand 1']
    #allocation9 [shape = 's32[2]{0}', space=sflag, size = 0x8, scoped, tag = 'scoped memory for tpu_custom_call.1']
    %10 = vsyncpa [#allocation3], 0
    %s11 = scalar_lea.sflag [#allocation3], 1
    %12 = vsyncpa %s11, 0
    %13 = vsyncpa [#allocation6], 0
    %14 = vsyncpa [#allocation4], 0
    %s15 = scalar_lea.sflag [#allocation4], 1
    %16 = vsyncpa %s15, 0
    %17 = vsyncpa [#allocation9], 0
    %s18 = scalar_lea.sflag [#allocation9], 1
    %19 = vsyncpa %s18, 0
    loop: start=0, step=1, limit=6
    $region2: #{tpu_custom_call.1} parent=1 // loop_pre_header
      _
    $region3: #{tpu_custom_call.1} parent=1 // loop_header
      %s21 = sphi 0, %s25
      %p22 = scmp.ge.s32.totalorder %s21, 6
      %s31 = sphi 0, %s33
      %s34 = sphi 0, %s31
      %s35 = sphi 0, %s34
      %s51 = sphi 0, %s35
      %s55 = sphi 0, %s55
      %s57 = sphi 0, %s55
      %s58 = sphi 0, %s57
      %s72 = sphi 0, %s58
      %s76 = sphi 0, %s76
      %s78 = sphi 0, %s76
      %s79 = sphi 0, %s78
      %s93 = sphi 0, %s79
      %s99 = sphi 0, %s101
      %s102 = sphi 0, %s99
      %s103 = sphi 0, %s102
      %s119 = sphi 0, %s103
      %s125 = sphi 0, %s127
      %s128 = sphi 0, %s125
      %s129 = sphi 0, %s128
      %s145 = sphi 0, %s129
    $region4: #{tpu_custom_call.1} parent=1 // loop_header_branch
      %24 = sbr.rel (%p22) target = $region8
    $region5: #{tpu_custom_call.1} parent=1 // loop_body
      %s26 = ssub.s32 %s21, 1
      %s27 = ssub.s32 %s21, 2
      %s28 = sadd.s32 %s21, 1
      %s29 = ssub.s32 %s21, %s28
      %p30 = scmp.eq.s32.totalorder %s29, 0
      %s32 = sadd.s32 %s31, 1
      %s33 = scalar_select %p30, %s31, %s32
      %p36 = pneg %p30
      %p37 = scmp.eq.s32.totalorder %s21, 3
      %p38 = por %p36, %p37
      %p39 = scmp.ne.s32.totalorder %s31, %s34
      %p40 = scmp.eq.s32.totalorder %s21, 0
      %p41 = por %p39, %p40
      %p42 = scmp.ne.s32.totalorder %s31, %s34
      %p43 = scmp.eq.s32.totalorder %s26, 3
      %p44 = por %p42, %p43
      %p45 = scmp.ne.s32.totalorder %s34, %s35
      %p46 = scmp.eq.s32.totalorder %s26, 0
      %p47 = por %p45, %p46
      %p48 = scmp.ne.s32.totalorder %s34, %s35
      %p49 = scmp.eq.s32.totalorder %s27, 3
      %p50 = por %p48, %p49
      %p52 = scmp.ne.s32.totalorder %s35, %s51
      %p53 = scmp.eq.s32.totalorder %s27, 0
      %p54 = por %p52, %p53
      %s56 = sadd.s32 %s55, 1
      %p59 = scmp.eq.s32.totalorder %s21, 3
      %p60 = scmp.ne.s32.totalorder %s55, %s57
      %p61 = scmp.eq.s32.totalorder %s21, 0
      %p62 = por %p60, %p61
      %p63 = scmp.ne.s32.totalorder %s55, %s57
      %p64 = scmp.eq.s32.totalorder %s26, 3
      %p65 = por %p63, %p64
      %p66 = scmp.ne.s32.totalorder %s57, %s58
      %p67 = scmp.eq.s32.totalorder %s26, 0
      %p68 = por %p66, %p67
      %p69 = scmp.ne.s32.totalorder %s57, %s58
      %p70 = scmp.eq.s32.totalorder %s27, 3
      %p71 = por %p69, %p70
      %p73 = scmp.ne.s32.totalorder %s58, %s72
      %p74 = scmp.eq.s32.totalorder %s27, 0
      %p75 = por %p73, %p74
      %s77 = sadd.s32 %s76, 1
      %p80 = scmp.eq.s32.totalorder %s21, 3
      %p81 = scmp.ne.s32.totalorder %s76, %s78
      %p82 = scmp.eq.s32.totalorder %s21, 0
      %p83 = por %p81, %p82
      %p84 = scmp.ne.s32.totalorder %s76, %s78
      %p85 = scmp.eq.s32.totalorder %s26, 3
      %p86 = por %p84, %p85
      %p87 = scmp.ne.s32.totalorder %s78, %s79
      %p88 = scmp.eq.s32.totalorder %s26, 0
      %p89 = por %p87, %p88
      %p90 = scmp.ne.s32.totalorder %s78, %s79
      %p91 = scmp.eq.s32.totalorder %s27, 3
      %p92 = por %p90, %p91
      %p94 = scmp.ne.s32.totalorder %s79, %s93
      %p95 = scmp.eq.s32.totalorder %s27, 0
      %p96 = por %p94, %p95
      %s97 = ssub.s32 %s21, %s28
      %p98 = scmp.eq.s32.totalorder %s97, 0
      %s100 = sadd.s32 %s99, 1
      %s101 = scalar_select %p98, %s99, %s100
      %p104 = pneg %p98
      %p105 = scmp.eq.s32.totalorder %s21, 3
      %p106 = por %p104, %p105
      %p107 = scmp.ne.s32.totalorder %s99, %s102
      %p108 = scmp.eq.s32.totalorder %s21, 0
      %p109 = por %p107, %p108
      %p110 = scmp.ne.s32.totalorder %s99, %s102
      %p111 = scmp.eq.s32.totalorder %s26, 3
      %p112 = por %p110, %p111
      %p113 = scmp.ne.s32.totalorder %s102, %s103
      %p114 = scmp.eq.s32.totalorder %s26, 0
      %p115 = por %p113, %p114
      %p116 = scmp.ne.s32.totalorder %s102, %s103
      %p117 = scmp.eq.s32.totalorder %s27, 3
      %p118 = por %p116, %p117
      %p120 = scmp.ne.s32.totalorder %s103, %s119
      %p121 = scmp.eq.s32.totalorder %s27, 0
      %p122 = por %p120, %p121
      %s123 = ssub.s32 %s21, %s28
      %p124 = scmp.eq.s32.totalorder %s123, 0
      %s126 = sadd.s32 %s125, 1
      %s127 = scalar_select %p124, %s125, %s126
      %p130 = pneg %p124
      %p131 = scmp.eq.s32.totalorder %s21, 3
      %p132 = por %p130, %p131
      %p133 = scmp.ne.s32.totalorder %s125, %s128
      %p134 = scmp.eq.s32.totalorder %s21, 0
      %p135 = por %p133, %p134
      %p136 = scmp.ne.s32.totalorder %s125, %s128
      %p137 = scmp.eq.s32.totalorder %s26, 3
      %p138 = por %p136, %p137
      %p139 = scmp.ne.s32.totalorder %s128, %s129
      %p140 = scmp.eq.s32.totalorder %s26, 0
      %p141 = por %p139, %p140
      %p142 = scmp.ne.s32.totalorder %s128, %s129
      %p143 = scmp.eq.s32.totalorder %s27, 3
      %p144 = por %p142, %p143
      %p146 = scmp.ne.s32.totalorder %s129, %s145
      %p147 = scmp.eq.s32.totalorder %s27, 0
      %p148 = por %p146, %p147
      %p149 = scmp.le.s32.totalorder 1, %s21
      %p150 = scmp.lt.s32.totalorder %s21, 5
      %p151 = pnand %p149, %p150
      %p152 = pneg %p151
      // Predicated region
      $region9: #{tpu_custom_call.1} parent=5 // pred_check
        _
      $region10: #{tpu_custom_call.1} parent=5 // pred_check_branch
        %154 = sbr.rel (%p151) target = $region12
      $region11: #{tpu_custom_call.1} parent=5 // pred_region
        %s155 = ssub.s32 %s21, 1
        // Predicated region
        $region13: #{tpu_custom_call.1} parent=11 // pred_check
          %p156 = pneg %p68
        $region14: #{tpu_custom_call.1} parent=11 // pred_check_branch
          %158 = sbr.rel (%p156) target = $region16
        $region15: #{tpu_custom_call.1} parent=11 // pred_region
          %s160 = ssub.s32 512, 512
          %161 = vsyncadd [#allocation6], %s160
          %s162 = sshll.u32 [#allocation5], 4
          %s163 = int_to_ptr.vmem [resolvable:$true] %s162
          %168 = dma.hbm_to_vmem [thread:$0]  %s1, 512, %s163, [#allocation6], 64, 64, 4
        $region16: #{tpu_custom_call.1} parent=11 // pred_fallthru
          _
        // Predicated region
        $region17: #{tpu_custom_call.1} parent=11 // pred_check
          %p169 = pneg %p89
        $region18: #{tpu_custom_call.1} parent=11 // pred_check_branch
          %171 = sbr.rel (%p169) target = $region20
        $region19: #{tpu_custom_call.1} parent=11 // pred_region
          _
        $region20: #{tpu_custom_call.1} parent=11 // pred_fallthru
          _
      $region12: #{tpu_custom_call.1} parent=5 // pred_fallthru
        _
      %p172 = scmp.lt.s32.totalorder %s21, 4
      // Predicated region
      $region21: #{tpu_custom_call.1} parent=5 // pred_check
        %p173 = pneg %p172
      $region22: #{tpu_custom_call.1} parent=5 // pred_check_branch
        %175 = sbr.rel (%p173) target = $region24
      $region23: #{tpu_custom_call.1} parent=5 // pred_region
        // Predicated region
        $region25: #{tpu_custom_call.1} parent=23 // pred_check
          %p176 = pneg %p41
        $region26: #{tpu_custom_call.1} parent=23 // pred_check_branch
          %178 = sbr.rel (%p176) target = $region28
        $region27: #{tpu_custom_call.1} parent=23 // pred_region
          %s179 = sand.u32 %s31, 1
          %s180 = scalar_lea.sflag [#allocation3], %s179
          %s181 = sand.u32 %s31, 1
          %s182 = smul.addr %s181, 16
          %s183 = scalar_lea.vmem [#allocation2], %s182
          %s184 = smul.u32 2, %s21
          %s186 = ssub.s32 256, 256
          %187 = vsyncadd %s180, %s186
          %s188 = smul.addr %s184, 128
          %s189 = scalar_lea.hbm %s0, %s188
          %s190 = sshll.u32 %s183, 4
          %s191 = int_to_ptr.vmem [resolvable:$true] %s190
          %196 = dma.hbm_to_vmem [thread:$0]  %s189, 256, %s191, %s180, 128, 128, 8
        $region28: #{tpu_custom_call.1} parent=23 // pred_fallthru
          _
      $region24: #{tpu_custom_call.1} parent=5 // pred_fallthru
        _
      %p197 = scmp.le.s32.totalorder 1, %s21
      %p198 = scmp.lt.s32.totalorder %s21, 5
      %p199 = pnand %p197, %p198
      %p200 = pneg %p199
      // Predicated region
      $region29: #{tpu_custom_call.1} parent=5 // pred_check
        _
      $region30: #{tpu_custom_call.1} parent=5 // pred_check_branch
        %202 = sbr.rel (%p199) target = $region32
      $region31: #{tpu_custom_call.1} parent=5 // pred_region
        %s203 = ssub.s32 %s21, 1
        %s204 = sand.u32 %s34, 1
        %s205 = scalar_lea.sflag [#allocation3], %s204
        %s206 = sand.u32 %s34, 1
        %s207 = smul.addr %s206, 16
        %s208 = scalar_lea.vmem [#allocation2], %s207
        // Predicated region
        $region33: #{tpu_custom_call.1} parent=31 // pred_check
          %p209 = pneg %p47
        $region34: #{tpu_custom_call.1} parent=31 // pred_check_branch
          %211 = sbr.rel (%p209) target = $region36
        $region35: #{tpu_custom_call.1} parent=31 // pred_region
          %212 = dma.done %s205, 256
        $region36: #{tpu_custom_call.1} parent=31 // pred_fallthru
          _
        // Predicated region
        $region37: #{tpu_custom_call.1} parent=31 // pred_check
          %p213 = pneg %p68
        $region38: #{tpu_custom_call.1} parent=31 // pred_check_branch
          %215 = sbr.rel (%p213) target = $region40
        $region39: #{tpu_custom_call.1} parent=31 // pred_region
          %216 = dma.done [#allocation6], 512
        $region40: #{tpu_custom_call.1} parent=31 // pred_fallthru
          _
        %s217 = sand.u32 %s34, 1
        %s218 = scalar_lea.sflag [#allocation3], %s217
        %s219 = sand.u32 %s34, 1
        %s220 = smul.addr %s219, 16
        %s221 = scalar_lea.vmem [#allocation2], %s220
        %p222 = pneg %p47
        %p223 = pneg %p44
        %p224 = pneg %p68
        %p225 = pneg %p65
        %p226 = pneg %p89
        %p227 = pneg %p86
        %p228 = pneg %p115
        %p229 = pneg %p112
        %s230 = sand.u32 %s102, 1
        %s231 = scalar_lea.sflag [#allocation4], %s230
        %s232 = sand.u32 %s102, 1
        %s233 = smul.addr %s232, 16
        %s234 = scalar_lea.vmem [#allocation7], %s233
        %p235 = pneg %p141
        %p236 = pneg %p138
        %s237 = sand.u32 %s128, 1
        %s238 = scalar_lea.sflag [#allocation9], %s237
        %s239 = sand.u32 %s128, 1
        %s240 = smul.addr %s239, 2
        %s241 = scalar_lea.vmem [#allocation8], %s240
        %s242 = smul.u32 2, %s26
        %s243 = smul.u32 2, %s26
        %v245 = vld [vmem:[%s208] sm:$0xff]
        %v246 = vld [vmem:[%s208 + $0x8] sm:$0xff]
        %v247 = vpack.c.bf16 %v246, %v245
        %v248 = vld [vmem:[#allocation5] sm:$0xf]
        %v249 = vld [vmem:[#allocation5 + $0x4] sm:$0xf]
        %v250 = vld [vmem:[#allocation5 + $0x8] sm:$0xf]
        %v251 = vld [vmem:[#allocation5 + $0xc] sm:$0xf]
        %v252 = vld [vmem:[#allocation5 + $0x10] sm:$0xf]
        %v253 = vld [vmem:[#allocation5 + $0x14] sm:$0xf]
        %v254 = vld [vmem:[#allocation5 + $0x18] sm:$0xf]
        %v255 = vld [vmem:[#allocation5 + $0x1c] sm:$0xf]
        %v256 = vld [vmem:[%s2] sm:$0x1]
        %v258 = vlaneseq
        %v259 = vshrl.u32 %v258, 7
        %v260 = vsub.s32 0, %v259
        %v261 = vrot.slane %v256, %v260
        %v271 = vunpack.c.l.b16 %v248
        %v272 = vunpack.c.l.b16 %v249
        %v273 = vunpack.c.l.b16 %v250
        %v274 = vunpack.c.l.b16 %v251
        %v275 = vunpack.c.l.b16 %v252
        %v276 = vunpack.c.l.b16 %v253
        %v277 = vunpack.c.l.b16 %v254
        %v278 = vunpack.c.l.b16 %v255
        %v279 = vpack.c.b16 %v272, %v271
        %v280 = vpack.c.b16 %v274, %v273
        %v281 = vpack.c.b16 %v276, %v275
        %v282 = vpack.c.b16 %v278, %v277
        %vm287 = vcmask 523264
        %v289 = vsel %vm287, %v247, 0
        %291 = vmatprep.subr.bf16.mxu0 0
        %292 = vmatpush1.bf16.msra.mxu0 %v279
        %293 = vmatprep.subr.bf16.mxu0 0
        %294 = vmatpush1.bf16.msra.mxu0 %v280
        %295 = vmatprep.subr.bf16.mxu0 0
        %296 = vmatpush1.bf16.msra.mxu0 %v281
        %297 = vmatprep.subr.bf16.mxu0 0
        %298 = vmatpush1.bf16.msra.mxu0 %v282
        %299 = vmatprep.subr.bf16.mxu0 0
        %300 = vmatpush1.bf16.msra.mxu0 0
        %301 = vmatprep.subr.bf16.mxu0 0
        %302 = vmatpush1.bf16.msra.mxu0 0
        %303 = vmatprep.subr.bf16.mxu0 0
        %304 = vmatpush1.bf16.msra.mxu0 0
        %305 = vmatprep.subr.bf16.mxu0 0
        %306 = vmatpush1.bf16.msra.mxu0 0
        %307 = vmatprep.subr.bf16.mxu0 0
        %308 = vmatpush1.bf16.msra.mxu0 0
        %309 = vmatprep.subr.bf16.mxu0 0
        %310 = vmatpush1.bf16.msra.mxu0 0
        %311 = vmatprep.subr.bf16.mxu0 0
        %312 = vmatpush1.bf16.msra.mxu0 0
        %313 = vmatprep.subr.bf16.mxu0 0
        %314 = vmatpush1.bf16.msra.mxu0 0
        %315 = vmatprep.subr.bf16.mxu0 0
        %316 = vmatpush1.bf16.msra.mxu0 0
        %317 = vmatprep.subr.bf16.mxu0 0
        %318 = vmatpush1.bf16.msra.mxu0 0
        %319 = vmatprep.subr.bf16.mxu0 0
        %320 = vmatpush1.bf16.msra.mxu0 0
        %321 = vmatprep.subr.bf16.mxu0 0
        %322 = vmatpush1.bf16.msra.mxu0 0
        %323 = vmatprep.mubr.bf16.mxu0 0
        %324 = vmatmul.mubr.bf16.gmra.mrb[0].mxu0 %v289
        %v325 = vpop.f32.mrb[0].mxu0
        %v326 = vadd.f32 %v261, %v325
        %v327 = vpop.f32.mrb[0].mxu0
        %v328 = vpop.f32.mrb[0].mxu0
        %v329 = vadd.f32 %v261, %v328
        %v330 = vpop.f32.mrb[0].mxu0
        %331 = vdwg.mxu0
        %vm332 = vcmp.gt.f32.partialorder %v326, 0.0
        %vm333 = vcmp.gt.f32.partialorder %v329, 0.0
        %v334 = vmin.f32 %v326, 0.0
        %v335 = vmin.f32 %v329, 0.0
        %v336 = vmul.f32 %v334, 1.442695
        %v337 = vpow.pop %v336
        %v338 = vmul.f32 %v335, 1.442695
        %v339 = vpow.pop %v338
        %v340 = vsub.f32 %v337, 1.0
        %v341 = vsub.f32 %v339, 1.0
        %v342 = vsel %vm332, %v326, %v340
        %v343 = vsel %vm333, %v329, %v341
        %344 = vst [vmem:[%s234] sm:$0xff] %v342
        %345 = vst [vmem:[%s234 + $0x8] sm:$0xff] %v343
        %v346 = vadd.f32 %v342, %v343
        %v347 = vrot.slane %v346, 4
        %v348 = vadd.f32 %v346, %v347
        %v349 = vrot.slane %v348, 2
        %v350 = vadd.f32 %v348, %v349
        %v351 = vrot.slane %v350, 1
        %v352 = vadd.f32 %v350, %v351
        %353 = vst [vmem:[%s241] sm:$0x1] %v352
        %v354 = vmul.f32 %v342, %v342
        %v355 = vmul.f32 %v343, %v343
        %v356 = vadd.f32 %v354, %v355
        %v357 = vrot.slane %v356, 4
        %v358 = vadd.f32 %v356, %v357
        %v359 = vrot.slane %v358, 2
        %v360 = vadd.f32 %v358, %v359
        %v361 = vrot.slane %v360, 1
        %v362 = vadd.f32 %v360, %v361
        %363 = vst [vmem:[%s241 + $0x1] sm:$0x1] %v362
        %s364 = sand.u32 %s102, 1
        %s365 = scalar_lea.sflag [#allocation4], %s364
        %s366 = sand.u32 %s102, 1
        %s367 = smul.addr %s366, 16
        %s368 = scalar_lea.vmem [#allocation7], %s367
        %s369 = sand.u32 %s128, 1
        %s370 = scalar_lea.sflag [#allocation9], %s369
        %s371 = sand.u32 %s128, 1
        %s372 = smul.addr %s371, 2
        %s373 = scalar_lea.vmem [#allocation8], %s372
        // Predicated region
        $region41: #{tpu_custom_call.1} parent=31 // pred_check
          %p374 = pneg %p112
        $region42: #{tpu_custom_call.1} parent=31 // pred_check_branch
          %376 = sbr.rel (%p374) target = $region44
        $region43: #{tpu_custom_call.1} parent=31 // pred_region
          %s377 = smul.u32 2, %s26
          %s379 = ssub.s32 256, 256
          %380 = vsyncadd %s365, %s379
          %s381 = smul.addr %s377, 128
          %s382 = scalar_lea.hbm %s3, %s381
          %s383 = sshll.u32 %s368, 4
          %s384 = int_to_ptr.vmem [resolvable:$true] %s383
          %389 = dma.vmem_to_hbm [thread:$0]  %s384, 256, %s382, %s365, 128, 128, 8
        $region44: #{tpu_custom_call.1} parent=31 // pred_fallthru
          _
        // Predicated region
        $region45: #{tpu_custom_call.1} parent=31 // pred_check
          %p390 = pneg %p138
        $region46: #{tpu_custom_call.1} parent=31 // pred_check_branch
          %392 = sbr.rel (%p390) target = $region48
        $region47: #{tpu_custom_call.1} parent=31 // pred_region
          %s394 = ssub.s32 32, 32
          %395 = vsyncadd %s370, %s394
          %s396 = smul.addr %s26, 32
          %s397 = scalar_lea.hbm %s4, %s396
          %s399 = sshll.u32 %s373, 4
          %s400 = int_to_ptr.vmem [resolvable:$true] %s399
          %402 = dma.vmem_to_hbm [thread:$0]  %s400, 32, %s397, %s370
        $region48: #{tpu_custom_call.1} parent=31 // pred_fallthru
          _
      $region32: #{tpu_custom_call.1} parent=5 // pred_fallthru
        _
      %p403 = scmp.le.s32.totalorder 2, %s21
      // Predicated region
      $region49: #{tpu_custom_call.1} parent=5 // pred_check
        %p404 = pneg %p403
      $region50: #{tpu_custom_call.1} parent=5 // pred_check_branch
        %406 = sbr.rel (%p404) target = $region52
      $region51: #{tpu_custom_call.1} parent=5 // pred_region
        %s407 = ssub.s32 %s21, 2
        // Predicated region
        $region53: #{tpu_custom_call.1} parent=51 // pred_check
          %p408 = pneg %p118
        $region54: #{tpu_custom_call.1} parent=51 // pred_check_branch
          %410 = sbr.rel (%p408) target = $region56
        $region55: #{tpu_custom_call.1} parent=51 // pred_region
          %s411 = sand.u32 %s103, 1
          %s412 = scalar_lea.sflag [#allocation4], %s411
          %s413 = sand.u32 %s103, 1
          %s414 = smul.addr %s413, 16
          %s415 = scalar_lea.vmem [#allocation7], %s414
          %416 = dma.done %s412, 256
        $region56: #{tpu_custom_call.1} parent=51 // pred_fallthru
          _
        // Predicated region
        $region57: #{tpu_custom_call.1} parent=51 // pred_check
          %p417 = pneg %p144
        $region58: #{tpu_custom_call.1} parent=51 // pred_check_branch
          %419 = sbr.rel (%p417) target = $region60
        $region59: #{tpu_custom_call.1} parent=51 // pred_region
          %s420 = sand.u32 %s129, 1
          %s421 = scalar_lea.sflag [#allocation9], %s420
          %s422 = sand.u32 %s129, 1
          %s423 = smul.addr %s422, 2
          %s424 = scalar_lea.vmem [#allocation8], %s423
          %425 = dma.done %s421, 32
        $region60: #{tpu_custom_call.1} parent=51 // pred_fallthru
          _
      $region52: #{tpu_custom_call.1} parent=5 // pred_fallthru
        _
    $region6: #{tpu_custom_call.1} parent=1 // loop_footer
      %s25 = sadd.s32 1, %s21
    $region7: #{tpu_custom_call.1} parent=1 // loop_footer_branch
      %20 = sbr.rel target = $region3
    $region8: #{tpu_custom_call.1} parent=1 // loop_exit
      _
    %426 = vsyncpa [#allocation3], 1
    %s427 = scalar_lea.sflag [#allocation3], 1
    %428 = vsyncpa %s427, 1
    %429 = vsyncpa [#allocation6], 1
    %430 = vsyncpa [#allocation4], 1
    %s431 = scalar_lea.sflag [#allocation4], 1
    %432 = vsyncpa %s431, 1
    %433 = vsyncpa [#allocation9], 1
    %s434 = scalar_lea.sflag [#allocation9], 1
    %435 = vsyncpa %s434, 1

// kernel: tpu_custom_call.1
$region0: #{tpu_custom_call.1}
  #allocation0 [shape = 'u32[]', space=smem, size = 0x4, offset = 0x4, fixed_abs, tag = 'smem constant byte address 0x4 - core index']
  #allocation1 [shape = 'u32[144,128]{1,0:T(1,128)}', space=vmem, size = 0x12000, scoped, tag = 'internal scratch']
  %s0 = inlined_call_operand.hbm [shape: f32[64,64], index: 0, kind: input, shape index: {}]
  %s1 = inlined_call_operand.hbm [shape: bf16[64,128], index: 1, kind: input, shape index: {}]
  %s2 = inlined_call_operand.vmem [shape: f32[1,128], index: 2, kind: input, shape index: {}]
  %s3 = inlined_call_operand.hbm [shape: f32[64,128], index: 3, kind: output, shape index: {0}]
  %s4 = inlined_call_operand.hbm [shape: f32[4,2,128], index: 4, kind: output, shape index: {1}]
  %5 = xla_tuple %s3, %s4
  %s6 = sld [smem:[#allocation0]]
  $region61: #{tpu_custom_call.1} parent=0
    _
  %s8 = ssub.s32 1, %s6
  %s9 = scalar_select 0, %s8, %s6
  $region1: #{tpu_custom_call.1} parent=0
    #allocation2 [shape = 'u8[16384]{0}', space=vmem, size = 0x4000, scoped, tag = 'input window, operand 0']
    #allocation3 [shape = 's32[2]{0}', space=sflag, size = 0x8, scoped, tag = 'scoped memory for tpu_custom_call.1']
    #allocation4 [shape = 's32[2]{0}', space=sflag, size = 0x8, scoped, tag = 'scoped memory for tpu_custom_call.1']
    #allocation5 [shape = 'u8[16384]{0}', space=vmem, size = 0x4000, scoped, tag = 'input window, operand 1, single buffered']
    #allocation6 [shape = 's32[1]{0}', space=sflag, size = 0x4, scoped, tag = 'scoped memory for tpu_custom_call.1']
    #allocation7 [shape = 'u8[16384]{0}', space=vmem, size = 0x4000, scoped, tag = 'output window, operand 0']
    #allocation8 [shape = 'u8[2048]{0}', space=vmem, size = 0x800, scoped, tag = 'output window, operand 1']
    #allocation9 [shape = 's32[2]{0}', space=sflag, size = 0x8, scoped, tag = 'scoped memory for tpu_custom_call.1']
    %10 = vsyncpa [#allocation3], 0
    %s11 = scalar_lea.sflag [#allocation3], 1
    %12 = vsyncpa %s11, 0
    %13 = vsyncpa [#allocation6], 0
    %14 = vsyncpa [#allocation4], 0
    %s15 = scalar_lea.sflag [#allocation4], 1
    %16 = vsyncpa %s15, 0
    %17 = vsyncpa [#allocation9], 0
    %s18 = scalar_lea.sflag [#allocation9], 1
    %19 = vsyncpa %s18, 0
    loop: start=0, step=1, limit=6
    $region2: #{tpu_custom_call.1} parent=1 // loop_pre_header
      _
    $region3: #{tpu_custom_call.1} parent=1 // loop_header
      %s21 = sphi 0, %s25
      %p22 = scmp.ge.s32.totalorder %s21, 6
      %s31 = sphi 0, %s33
      %s34 = sphi 0, %s31
      %s35 = sphi 0, %s34
      %s51 = sphi 0, %s35
      %s55 = sphi 0, %s55
      %s57 = sphi 0, %s55
      %s58 = sphi 0, %s57
      %s72 = sphi 0, %s58
      %s76 = sphi 0, %s76
      %s78 = sphi 0, %s76
      %s79 = sphi 0, %s78
      %s93 = sphi 0, %s79
      %s99 = sphi 0, %s101
      %s102 = sphi 0, %s99
      %s103 = sphi 0, %s102
      %s119 = sphi 0, %s103
      %s125 = sphi 0, %s127
      %s128 = sphi 0, %s125
      %s129 = sphi 0, %s128
      %s145 = sphi 0, %s129
    $region4: #{tpu_custom_call.1} parent=1 // loop_header_branch
      %24 = sbr.rel (%p22) target = $region8
    $region5: #{tpu_custom_call.1} parent=1 // loop_body
      %s26 = ssub.s32 %s21, 1
      %s27 = ssub.s32 %s21, 2
      %s28 = sadd.s32 %s21, 1
      %s29 = ssub.s32 %s21, %s28
      %p30 = scmp.eq.s32.totalorder %s29, 0
      %s32 = sadd.s32 %s31, 1
      %s33 = scalar_select %p30, %s31, %s32
      %p36 = pneg %p30
      %p37 = scmp.eq.s32.totalorder %s21, 3
      %p38 = por %p36, %p37
      %p39 = scmp.ne.s32.totalorder %s31, %s34
      %p40 = scmp.eq.s32.totalorder %s21, 0
      %p41 = por %p39, %p40
      %p42 = scmp.ne.s32.totalorder %s31, %s34
      %p43 = scmp.eq.s32.totalorder %s26, 3
      %p44 = por %p42, %p43
      %p45 = scmp.ne.s32.totalorder %s34, %s35
      %p46 = scmp.eq.s32.totalorder %s26, 0
      %p47 = por %p45, %p46
      %p48 = scmp.ne.s32.totalorder %s34, %s35
      %p49 = scmp.eq.s32.totalorder %s27, 3
      %p50 = por %p48, %p49
      %p52 = scmp.ne.s32.totalorder %s35, %s51
      %p53 = scmp.eq.s32.totalorder %s27, 0
      %p54 = por %p52, %p53
      %s56 = sadd.s32 %s55, 1
      %p59 = scmp.eq.s32.totalorder %s21, 3
      %p60 = scmp.ne.s32.totalorder %s55, %s57
      %p61 = scmp.eq.s32.totalorder %s21, 0
      %p62 = por %p60, %p61
      %p63 = scmp.ne.s32.totalorder %s55, %s57
      %p64 = scmp.eq.s32.totalorder %s26, 3
      %p65 = por %p63, %p64
      %p66 = scmp.ne.s32.totalorder %s57, %s58
      %p67 = scmp.eq.s32.totalorder %s26, 0
      %p68 = por %p66, %p67
      %p69 = scmp.ne.s32.totalorder %s57, %s58
      %p70 = scmp.eq.s32.totalorder %s27, 3
      %p71 = por %p69, %p70
      %p73 = scmp.ne.s32.totalorder %s58, %s72
      %p74 = scmp.eq.s32.totalorder %s27, 0
      %p75 = por %p73, %p74
      %s77 = sadd.s32 %s76, 1
      %p80 = scmp.eq.s32.totalorder %s21, 3
      %p81 = scmp.ne.s32.totalorder %s76, %s78
      %p82 = scmp.eq.s32.totalorder %s21, 0
      %p83 = por %p81, %p82
      %p84 = scmp.ne.s32.totalorder %s76, %s78
      %p85 = scmp.eq.s32.totalorder %s26, 3
      %p86 = por %p84, %p85
      %p87 = scmp.ne.s32.totalorder %s78, %s79
      %p88 = scmp.eq.s32.totalorder %s26, 0
      %p89 = por %p87, %p88
      %p90 = scmp.ne.s32.totalorder %s78, %s79
      %p91 = scmp.eq.s32.totalorder %s27, 3
      %p92 = por %p90, %p91
      %p94 = scmp.ne.s32.totalorder %s79, %s93
      %p95 = scmp.eq.s32.totalorder %s27, 0
      %p96 = por %p94, %p95
      %s97 = ssub.s32 %s21, %s28
      %p98 = scmp.eq.s32.totalorder %s97, 0
      %s100 = sadd.s32 %s99, 1
      %s101 = scalar_select %p98, %s99, %s100
      %p104 = pneg %p98
      %p105 = scmp.eq.s32.totalorder %s21, 3
      %p106 = por %p104, %p105
      %p107 = scmp.ne.s32.totalorder %s99, %s102
      %p108 = scmp.eq.s32.totalorder %s21, 0
      %p109 = por %p107, %p108
      %p110 = scmp.ne.s32.totalorder %s99, %s102
      %p111 = scmp.eq.s32.totalorder %s26, 3
      %p112 = por %p110, %p111
      %p113 = scmp.ne.s32.totalorder %s102, %s103
      %p114 = scmp.eq.s32.totalorder %s26, 0
      %p115 = por %p113, %p114
      %p116 = scmp.ne.s32.totalorder %s102, %s103
      %p117 = scmp.eq.s32.totalorder %s27, 3
      %p118 = por %p116, %p117
      %p120 = scmp.ne.s32.totalorder %s103, %s119
      %p121 = scmp.eq.s32.totalorder %s27, 0
      %p122 = por %p120, %p121
      %s123 = ssub.s32 %s21, %s28
      %p124 = scmp.eq.s32.totalorder %s123, 0
      %s126 = sadd.s32 %s125, 1
      %s127 = scalar_select %p124, %s125, %s126
      %p130 = pneg %p124
      %p131 = scmp.eq.s32.totalorder %s21, 3
      %p132 = por %p130, %p131
      %p133 = scmp.ne.s32.totalorder %s125, %s128
      %p134 = scmp.eq.s32.totalorder %s21, 0
      %p135 = por %p133, %p134
      %p136 = scmp.ne.s32.totalorder %s125, %s128
      %p137 = scmp.eq.s32.totalorder %s26, 3
      %p138 = por %p136, %p137
      %p139 = scmp.ne.s32.totalorder %s128, %s129
      %p140 = scmp.eq.s32.totalorder %s26, 0
      %p141 = por %p139, %p140
      %p142 = scmp.ne.s32.totalorder %s128, %s129
      %p143 = scmp.eq.s32.totalorder %s27, 3
      %p144 = por %p142, %p143
      %p146 = scmp.ne.s32.totalorder %s129, %s145
      %p147 = scmp.eq.s32.totalorder %s27, 0
      %p148 = por %p146, %p147
      %p149 = scmp.le.s32.totalorder 1, %s21
      %p150 = scmp.lt.s32.totalorder %s21, 5
      %p151 = pnand %p149, %p150
      %p152 = pneg %p151
      // Predicated region
      $region9: #{tpu_custom_call.1} parent=5 // pred_check
        _
      $region10: #{tpu_custom_call.1} parent=5 // pred_check_branch
        %154 = sbr.rel (%p151) target = $region12
      $region11: #{tpu_custom_call.1} parent=5 // pred_region
        %s155 = ssub.s32 %s21, 1
        // Predicated region
        $region13: #{tpu_custom_call.1} parent=11 // pred_check
          %p156 = pneg %p68
        $region14: #{tpu_custom_call.1} parent=11 // pred_check_branch
          %158 = sbr.rel (%p156) target = $region16
        $region15: #{tpu_custom_call.1} parent=11 // pred_region
          %s160 = ssub.s32 512, 512
          %161 = vsyncadd [#allocation6], %s160
          %s162 = sshll.u32 [#allocation5], 4
          %s163 = int_to_ptr.vmem [resolvable:$true] %s162
          %168 = dma.hbm_to_vmem [thread:$0]  %s1, 512, %s163, [#allocation6], 64, 64, 4
        $region16: #{tpu_custom_call.1} parent=11 // pred_fallthru
          _
        // Predicated region
        $region17: #{tpu_custom_call.1} parent=11 // pred_check
          %p169 = pneg %p89
        $region18: #{tpu_custom_call.1} parent=11 // pred_check_branch
          %171 = sbr.rel (%p169) target = $region20
        $region19: #{tpu_custom_call.1} parent=11 // pred_region
          _
        $region20: #{tpu_custom_call.1} parent=11 // pred_fallthru
          _
      $region12: #{tpu_custom_call.1} parent=5 // pred_fallthru
        _
      %p172 = scmp.lt.s32.totalorder %s21, 4
      // Predicated region
      $region21: #{tpu_custom_call.1} parent=5 // pred_check
        %p173 = pneg %p172
      $region22: #{tpu_custom_call.1} parent=5 // pred_check_branch
        %175 = sbr.rel (%p173) target = $region24
      $region23: #{tpu_custom_call.1} parent=5 // pred_region
        // Predicated region
        $region25: #{tpu_custom_call.1} parent=23 // pred_check
          %p176 = pneg %p41
        $region26: #{tpu_custom_call.1} parent=23 // pred_check_branch
          %178 = sbr.rel (%p176) target = $region28
        $region27: #{tpu_custom_call.1} parent=23 // pred_region
          %s179 = sand.u32 %s31, 1
          %s180 = scalar_lea.sflag [#allocation3], %s179
          %s181 = sand.u32 %s31, 1
          %s182 = smul.addr %s181, 16
          %s183 = scalar_lea.vmem [#allocation2], %s182
          %s184 = smul.u32 2, %s21
          %s186 = ssub.s32 256, 256
          %187 = vsyncadd %s180, %s186
          %s188 = smul.addr %s184, 128
          %s189 = scalar_lea.hbm %s0, %s188
          %s190 = sshll.u32 %s183, 4
          %s191 = int_to_ptr.vmem [resolvable:$true] %s190
          %196 = dma.hbm_to_vmem [thread:$0]  %s189, 256, %s191, %s180, 128, 128, 8
        $region28: #{tpu_custom_call.1} parent=23 // pred_fallthru
          _
      $region24: #{tpu_custom_call.1} parent=5 // pred_fallthru
        _
      %p197 = scmp.le.s32.totalorder 1, %s21
      %p198 = scmp.lt.s32.totalorder %s21, 5
      %p199 = pnand %p197, %p198
      %p200 = pneg %p199
      // Predicated region
      $region29: #{tpu_custom_call.1} parent=5 // pred_check
        _
      $region30: #{tpu_custom_call.1} parent=5 // pred_check_branch
        %202 = sbr.rel (%p199) target = $region32
      $region31: #{tpu_custom_call.1} parent=5 // pred_region
        %s203 = ssub.s32 %s21, 1
        %s204 = sand.u32 %s34, 1
        %s205 = scalar_lea.sflag [#allocation3], %s204
        %s206 = sand.u32 %s34, 1
        %s207 = smul.addr %s206, 16
        %s208 = scalar_lea.vmem [#allocation2], %s207
        // Predicated region
        $region33: #{tpu_custom_call.1} parent=31 // pred_check
          %p209 = pneg %p47
        $region34: #{tpu_custom_call.1} parent=31 // pred_check_branch
          %211 = sbr.rel (%p209) target = $region36
        $region35: #{tpu_custom_call.1} parent=31 // pred_region
          %212 = dma.done %s205, 256
        $region36: #{tpu_custom_call.1} parent=31 // pred_fallthru
          _
        // Predicated region
        $region37: #{tpu_custom_call.1} parent=31 // pred_check
          %p213 = pneg %p68
        $region38: #{tpu_custom_call.1} parent=31 // pred_check_branch
          %215 = sbr.rel (%p213) target = $region40
        $region39: #{tpu_custom_call.1} parent=31 // pred_region
          %216 = dma.done [#allocation6], 512
        $region40: #{tpu_custom_call.1} parent=31 // pred_fallthru
          _
        %s217 = sand.u32 %s34, 1
        %s218 = scalar_lea.sflag [#allocation3], %s217
        %s219 = sand.u32 %s34, 1
        %s220 = smul.addr %s219, 16
        %s221 = scalar_lea.vmem [#allocation2], %s220
        %p222 = pneg %p47
        %p223 = pneg %p44
        %p224 = pneg %p68
        %p225 = pneg %p65
        %p226 = pneg %p89
        %p227 = pneg %p86
        %p228 = pneg %p115
        %p229 = pneg %p112
        %s230 = sand.u32 %s102, 1
        %s231 = scalar_lea.sflag [#allocation4], %s230
        %s232 = sand.u32 %s102, 1
        %s233 = smul.addr %s232, 16
        %s234 = scalar_lea.vmem [#allocation7], %s233
        %p235 = pneg %p141
        %p236 = pneg %p138
        %s237 = sand.u32 %s128, 1
        %s238 = scalar_lea.sflag [#allocation9], %s237
        %s239 = sand.u32 %s128, 1
        %s240 = smul.addr %s239, 2
        %s241 = scalar_lea.vmem [#allocation8], %s240
        %s242 = smul.u32 2, %s26
        %s243 = smul.u32 2, %s26
        %v245 = vld [vmem:[%s208] sm:$0xff]
        %v246 = vld [vmem:[%s208 + $0x8] sm:$0xff]
        %v247 = vpack.c.bf16 %v246, %v245
        %v248 = vld [vmem:[#allocation5] sm:$0xf]
        %v249 = vld [vmem:[#allocation5 + $0x4] sm:$0xf]
        %v250 = vld [vmem:[#allocation5 + $0x8] sm:$0xf]
        %v251 = vld [vmem:[#allocation5 + $0xc] sm:$0xf]
        %v252 = vld [vmem:[#allocation5 + $0x10] sm:$0xf]
        %v253 = vld [vmem:[#allocation5 + $0x14] sm:$0xf]
        %v254 = vld [vmem:[#allocation5 + $0x18] sm:$0xf]
        %v255 = vld [vmem:[#allocation5 + $0x1c] sm:$0xf]
        %v256 = vld [vmem:[%s2] sm:$0x1]
        %v258 = vlaneseq
        %v259 = vshrl.u32 %v258, 7
        %v260 = vsub.s32 0, %v259
        %v261 = vrot.slane %v256, %v260
        %v271 = vunpack.c.l.b16 %v248
        %v272 = vunpack.c.l.b16 %v249
        %v273 = vunpack.c.l.b16 %v250
        %v274 = vunpack.c.l.b16 %v251
        %v275 = vunpack.c.l.b16 %v252
        %v276 = vunpack.c.l.b16 %v253
        %v277 = vunpack.c.l.b16 %v254
        %v278 = vunpack.c.l.b16 %v255
        %v279 = vpack.c.b16 %v272, %v271
        %v280 = vpack.c.b16 %v274, %v273
        %v281 = vpack.c.b16 %v276, %v275
        %v282 = vpack.c.b16 %v278, %v277
        %vm287 = vcmask 523264
        %v289 = vsel %vm287, %v247, 0
        %291 = vmatprep.subr.bf16.mxu0 0
        %292 = vmatpush1.bf16.msra.mxu0 %v279
        %293 = vmatprep.subr.bf16.mxu0 0
        %294 = vmatpush1.bf16.msra.mxu0 %v280
        %295 = vmatprep.subr.bf16.mxu0 0
        %296 = vmatpush1.bf16.msra.mxu0 %v281
        %297 = vmatprep.subr.bf16.mxu0 0
        %298 = vmatpush1.bf16.msra.mxu0 %v282
        %299 = vmatprep.subr.bf16.mxu0 0
        %300 = vmatpush1.bf16.msra.mxu0 0
        %301 = vmatprep.subr.bf16.mxu0 0
        %302 = vmatpush1.bf16.msra.mxu0 0
        %303 = vmatprep.subr.bf16.mxu0 0
        %304 = vmatpush1.bf16.msra.mxu0 0
        %305 = vmatprep.subr.bf16.mxu0 0
        %306 = vmatpush1.bf16.msra.mxu0 0
        %307 = vmatprep.subr.bf16.mxu0 0
        %308 = vmatpush1.bf16.msra.mxu0 0
        %309 = vmatprep.subr.bf16.mxu0 0
        %310 = vmatpush1.bf16.msra.mxu0 0
        %311 = vmatprep.subr.bf16.mxu0 0
        %312 = vmatpush1.bf16.msra.mxu0 0
        %313 = vmatprep.subr.bf16.mxu0 0
        %314 = vmatpush1.bf16.msra.mxu0 0
        %315 = vmatprep.subr.bf16.mxu0 0
        %316 = vmatpush1.bf16.msra.mxu0 0
        %317 = vmatprep.subr.bf16.mxu0 0
        %318 = vmatpush1.bf16.msra.mxu0 0
        %319 = vmatprep.subr.bf16.mxu0 0
        %320 = vmatpush1.bf16.msra.mxu0 0
        %321 = vmatprep.subr.bf16.mxu0 0
        %322 = vmatpush1.bf16.msra.mxu0 0
        %323 = vmatprep.mubr.bf16.mxu0 0
        %324 = vmatmul.mubr.bf16.gmra.mrb[0].mxu0 %v289
        %v325 = vpop.f32.mrb[0].mxu0
        %v326 = vadd.f32 %v261, %v325
        %v327 = vpop.f32.mrb[0].mxu0
        %v328 = vpop.f32.mrb[0].mxu0
        %v329 = vadd.f32 %v261, %v328
        %v330 = vpop.f32.mrb[0].mxu0
        %331 = vdwg.mxu0
        %vm332 = vcmp.gt.f32.partialorder %v326, 0.0
        %vm333 = vcmp.gt.f32.partialorder %v329, 0.0
        %v334 = vmin.f32 %v326, 0.0
        %v335 = vmin.f32 %v329, 0.0
        %v336 = vmul.f32 %v334, 1.442695
        %v337 = vpow.pop %v336
        %v338 = vmul.f32 %v335, 1.442695
        %v339 = vpow.pop %v338
        %v340 = vsub.f32 %v337, 1.0
        %v341 = vsub.f32 %v339, 1.0
        %v342 = vsel %vm332, %v326, %v340
        %v343 = vsel %vm333, %v329, %v341
        %344 = vst [vmem:[%s234] sm:$0xff] %v342
        %345 = vst [vmem:[%s234 + $0x8] sm:$0xff] %v343
        %v346 = vadd.f32 %v342, %v343
        %v347 = vrot.slane %v346, 4
        %v348 = vadd.f32 %v346, %v347
        %v349 = vrot.slane %v348, 2
        %v350 = vadd.f32 %v348, %v349
        %v351 = vrot.slane %v350, 1
        %v352 = vadd.f32 %v350, %v351
        %353 = vst [vmem:[%s241] sm:$0x1] %v352
        %v354 = vmul.f32 %v342, %v342
        %v355 = vmul.f32 %v343, %v343
        %v356 = vadd.f32 %v354, %v355
        %v357 = vrot.slane %v356, 4
        %v358 = vadd.f32 %v356, %v357
        %v359 = vrot.slane %v358, 2
        %v360 = vadd.f32 %v358, %v359
        %v361 = vrot.slane %v360, 1
        %v362 = vadd.f32 %v360, %v361
        %363 = vst [vmem:[%s241 + $0x1] sm:$0x1] %v362
        %s364 = sand.u32 %s102, 1
        %s365 = scalar_lea.sflag [#allocation4], %s364
        %s366 = sand.u32 %s102, 1
        %s367 = smul.addr %s366, 16
        %s368 = scalar_lea.vmem [#allocation7], %s367
        %s369 = sand.u32 %s128, 1
        %s370 = scalar_lea.sflag [#allocation9], %s369
        %s371 = sand.u32 %s128, 1
        %s372 = smul.addr %s371, 2
        %s373 = scalar_lea.vmem [#allocation8], %s372
        // Predicated region
        $region41: #{tpu_custom_call.1} parent=31 // pred_check
          %p374 = pneg %p112
        $region42: #{tpu_custom_call.1} parent=31 // pred_check_branch
          %376 = sbr.rel (%p374) target = $region44
        $region43: #{tpu_custom_call.1} parent=31 // pred_region
          %s377 = smul.u32 2, %s26
          %s379 = ssub.s32 256, 256
          %380 = vsyncadd %s365, %s379
          %s381 = smul.addr %s377, 128
          %s382 = scalar_lea.hbm %s3, %s381
          %s383 = sshll.u32 %s368, 4
          %s384 = int_to_ptr.vmem [resolvable:$true] %s383
          %389 = dma.vmem_to_hbm [thread:$0]  %s384, 256, %s382, %s365, 128, 128, 8
        $region44: #{tpu_custom_call.1} parent=31 // pred_fallthru
          _
        // Predicated region
        $region45: #{tpu_custom_call.1} parent=31 // pred_check
          %p390 = pneg %p138
        $region46: #{tpu_custom_call.1} parent=31 // pred_check_branch
          %392 = sbr.rel (%p390) target = $region48
        $region47: #{tpu_custom_call.1} parent=31 // pred_region
          %s394 = ssub.s32 32, 32
          %395 = vsyncadd %s370, %s394
          %s396 = smul.addr %s26, 32
          %s397 = scalar_lea.hbm %s4, %s396
          %s399 = sshll.u32 %s373, 4
          %s400 = int_to_ptr.vmem [resolvable:$true] %s399
          %402 = dma.vmem_to_hbm [thread:$0]  %s400, 32, %s397, %s370
        $region48: #{tpu_custom_call.1} parent=31 // pred_fallthru
          _
      $region32: #{tpu_custom_call.1} parent=5 // pred_fallthru
        _
      %p403 = scmp.le.s32.totalorder 2, %s21
      // Predicated region
      $region49: #{tpu_custom_call.1} parent=5 // pred_check
        %p404 = pneg %p403
      $region50: #{tpu_custom_call.1} parent=5 // pred_check_branch
        %406 = sbr.rel (%p404) target = $region52
      $region51: #{tpu_custom_call.1} parent=5 // pred_region
        %s407 = ssub.s32 %s21, 2
        // Predicated region
        $region53: #{tpu_custom_call.1} parent=51 // pred_check
          %p408 = pneg %p118
        $region54: #{tpu_custom_call.1} parent=51 // pred_check_branch
          %410 = sbr.rel (%p408) target = $region56
        $region55: #{tpu_custom_call.1} parent=51 // pred_region
          %s411 = sand.u32 %s103, 1
          %s412 = scalar_lea.sflag [#allocation4], %s411
          %s413 = sand.u32 %s103, 1
          %s414 = smul.addr %s413, 16
          %s415 = scalar_lea.vmem [#allocation7], %s414
          %416 = dma.done %s412, 256
        $region56: #{tpu_custom_call.1} parent=51 // pred_fallthru
          _
        // Predicated region
        $region57: #{tpu_custom_call.1} parent=51 // pred_check
          %p417 = pneg %p144
        $region58: #{tpu_custom_call.1} parent=51 // pred_check_branch
          %419 = sbr.rel (%p417) target = $region60
        $region59: #{tpu_custom_call.1} parent=51 // pred_region
          %s420 = sand.u32 %s129, 1
          %s421 = scalar_lea.sflag [#allocation9], %s420
          %s422 = sand.u32 %s129, 1
          %s423 = smul.addr %s422, 2
          %s424 = scalar_lea.vmem [#allocation8], %s423
          %425 = dma.done %s421, 32
        $region60: #{tpu_custom_call.1} parent=51 // pred_fallthru
          _
      $region52: #{tpu_custom_call.1} parent=5 // pred_fallthru
        _
    $region6: #{tpu_custom_call.1} parent=1 // loop_footer
      %s25 = sadd.s32 1, %s21
    $region7: #{tpu_custom_call.1} parent=1 // loop_footer_branch
      %20 = sbr.rel target = $region3
    $region8: #{tpu_custom_call.1} parent=1 // loop_exit
      _
    %426 = vsyncpa [#allocation3], 1
    %s427 = scalar_lea.sflag [#allocation3], 1
    %428 = vsyncpa %s427, 1
    %429 = vsyncpa [#allocation6], 1
    %430 = vsyncpa [#allocation4], 1
    %s431 = scalar_lea.sflag [#allocation4], 1
    %432 = vsyncpa %s431, 1
    %433 = vsyncpa [#allocation9], 1
    %s434 = scalar_lea.sflag [#allocation9], 1
    %435 = vsyncpa %s434, 1

</llo_original>
